<compile_context>
chip_gen: v5e
topology: v5e:2x2
jax: 0.10.0
libtpu: 0.0.40
codegen_flags: <defaults>
</compile_context>

<pallas_src>
import jax
import jax.numpy as jnp
from jax.experimental import pallas as pl
from jax.experimental.pallas import tpu as pltpu

LARGE_NUMBER = 600.0


# ----------------------------------------------------------------------------
# Kernel
# ----------------------------------------------------------------------------
def _make_kernel(s, W, Wo):
    Wv = W - s + 1

    def kernel(d_ref, m_ref, sel_ref, dout_ref, mout_ref):
        # d_ref, m_ref: (TM, s*W); sel_ref: (Wv, Wo) bf16 one-hot columns;
        # dout_ref, mout_ref: (TM, Wo)
        sel = sel_ref[...]

        # ---- encode + max over the s pooling rows (H direction) -------------
        # The s row-chunks of each output row are packed contiguously along the
        # lane dim, so this is pure elementwise work.
        acc_e = None
        acc_m = None
        for i in range(s):
            d_i = d_ref[:, i * W:(i + 1) * W]
            m_i = m_ref[:, i * W:(i + 1) * W]
            enc_i = (m_i - 1.0) * LARGE_NUMBER - d_i        # folded negations
            if acc_e is None:
                acc_e, acc_m = enc_i, m_i
            else:
                acc_e = jnp.maximum(acc_e, enc_i)
                acc_m = jnp.maximum(acc_m, m_i)

        # ---- max over the s pooling columns (W direction) -------------------
        # Window max at every lane via unit-stride shifted slices.
        win_e = acc_e[:, 0:Wv]
        win_m = acc_m[:, 0:Wv]
        for j in range(1, s):
            win_e = jnp.maximum(win_e, acc_e[:, j:j + Wv])
            win_m = jnp.maximum(win_m, acc_m[:, j:j + Wv])

        # ---- decimate every s-th lane (exact 0/1 selection matmuls) ---------
        # Mask values are exactly {0.0, 1.0} -> a single bf16 matmul is exact.
        m_sel = jnp.dot(win_m.astype(jnp.bfloat16), sel,
                        preferred_element_type=jnp.float32)

        # Depth path: select the ENCODED window max exactly via a 3-piece bf16
        # split (each bf16 matmul against 0/1 weights is exact; the grouped
        # re-sum reconstructs f32 bit-exactly). Do NOT reassociate this sum.
        e_hi = win_e.astype(jnp.bfloat16)
        r1 = win_e - e_hi.astype(jnp.float32)
        e_mid = r1.astype(jnp.bfloat16)
        e_lo = (r1 - e_mid.astype(jnp.float32)).astype(jnp.bfloat16)
        dot = lambda t: jnp.dot(t, sel, preferred_element_type=jnp.float32)
        e_sel = dot(e_hi) + (dot(e_mid) + dot(e_lo))

        # Decode AFTER decimation, at width Wo (values stay exact: m_sel is
        # {0,1}, so (m_sel-1)*600 == -(1-m_sel)*600 exactly).
        dout_ref[...] = (m_sel - 1.0) * LARGE_NUMBER - e_sel
        mout_ref[...] = m_sel

    return kernel


# ----------------------------------------------------------------------------
# Tiling / VMEM sizing
# ----------------------------------------------------------------------------
def _round_up(x, m):
    return ((x + m - 1) // m) * m


def _vmem_budget_and_limit():
    """Generation-aware sizing: ~45% of VMEM as per-step budget, ~75% as the
    scoped limit (capped at 100 MiB for the 128 MiB v5e/v6e parts)."""
    cap = 64 * 1024 * 1024        # conservative default (v7x per-core VMEM)
    try:
        info = pltpu.get_tpu_info()
        c = getattr(info, "vmem_capacity_bytes", None)
        if c:
            cap = int(c)
    except Exception:
        pass
    budget = int(cap * 0.45)
    limit = min(int(cap * 0.75), 100 * 1024 * 1024)
    return budget, limit


def _choose_tiling(rows, s, W, Wo, budget):
    """Rows per grid step + step count.

    No divisor constraint: the ragged last block is masked by Pallas (the
    kernel math is row-local, so padded tail rows never affect valid rows).
    tm is the largest multiple of 8 that fits the VMEM budget; when more than
    one step is needed, prefer an even step count (dual-TC v7x balance)."""
    Wv = W - s + 1
    # Per-row VMEM bytes: 2 inputs + 2 outputs (double-buffered) + in-kernel
    # temporaries (headroom for slice copies / bf16 pieces / accumulators).
    per_row = (2 * 2 * (s * W) + 2 * 2 * Wo + (2 * s + 8) * W) * 4
    # Fixed bytes: sel block (bf16, double-buffered) + compiler scratch.
    fixed = 2 * Wv * Wo * 2 + (2 << 20)

    tm_max = max(8, ((budget - fixed) // per_row) // 8 * 8)

    rows8 = _round_up(rows, 8)
    if rows8 <= tm_max:
        return rows8, 1

    tm = tm_max
    steps = -(-rows // tm)
    if steps % 2:                      # prefer an even number of steps
        steps += 1
        tm = max(8, _round_up(-(-rows // steps), 8))
        steps = -(-rows // tm)         # re-derive coverage
    return tm, steps


# ----------------------------------------------------------------------------
# Wrapper
# ----------------------------------------------------------------------------
def sparse_downsample_close(d, mask, stride):
    """d, mask: (N, C, H, W) float32. Returns (d_result, mask_result)."""
    s = int(stride)
    d = jnp.asarray(d, jnp.float32)
    mask = jnp.asarray(mask, jnp.float32)
    N, C, H, W = d.shape
    Ho, Wo = H // s, W // s
    if Ho == 0 or Wo == 0:
        raise ValueError("spatial dims smaller than stride")
    if (H % s) or (W % s):
        # PyTorch MaxPool2d silently drops the remainder; crop to match.
        d = d[:, :, :Ho * s, :Wo * s]
        mask = mask[:, :, :Ho * s, :Wo * s]
        H, W = Ho * s, Wo * s

    rows = N * C * Ho                  # one row per output (n, c, ho)
    Wv = W - s + 1

    # Metadata-only reshape: row (n*C + c)*Ho + ho holds input rows
    # h = ho*s .. ho*s+s-1 of channel (n, c), concatenated along the lane dim.
    d2 = d.reshape(rows, s * W)
    m2 = mask.reshape(rows, s * W)

    # 0/1 selection matrix: column wo picks lane wo*s of the window-maxed lanes.
    sel = (jnp.arange(Wv, dtype=jnp.int32)[:, None]
           == (jnp.arange(Wo, dtype=jnp.int32) * s)[None, :]).astype(jnp.bfloat16)

    budget, vmem_limit = _vmem_budget_and_limit()
    tm, steps = _choose_tiling(rows, s, W, Wo, budget)

    dout, mout = pl.pallas_call(
        _make_kernel(s, W, Wo),
        grid=(steps,),
        in_specs=[
            pl.BlockSpec((tm, s * W), lambda g: (g, 0)),
            pl.BlockSpec((tm, s * W), lambda g: (g, 0)),
            pl.BlockSpec((Wv, Wo), lambda g: (0, 0)),   # constant: fetched once
        ],
        out_specs=(
            pl.BlockSpec((tm, Wo), lambda g: (g, 0)),
            pl.BlockSpec((tm, Wo), lambda g: (g, 0)),
        ),
        out_shape=(
            jax.ShapeDtypeStruct((rows, Wo), jnp.float32),
            jax.ShapeDtypeStruct((rows, Wo), jnp.float32),
        ),
        compiler_params=pltpu.CompilerParams(
            dimension_semantics=("parallel",),
            vmem_limit_bytes=vmem_limit,
        ),
    )(d2, m2, sel)

    return dout.reshape(N, C, Ho, Wo), mout.reshape(N, C, Ho, Wo)


# ----------------------------------------------------------------------------
# Pure-JAX reference + test
# ----------------------------------------------------------------------------
def _reference(d, mask, stride):
    N, C, H, W = d.shape
    s = stride
    Ho, Wo = H // s, W // s

    def pool(x):
        return x.reshape(N, C, Ho, s, Wo, s).max(axis=(3, 5))

    enc = -(1.0 - mask) * LARGE_NUMBER - d
    d_pool = -pool(enc)
    m_res = pool(mask)
    d_res = d_pool - (1.0 - m_res) * LARGE_NUMBER
    return d_res, m_res


if __name__ == "__main__":
    key = jax.random.PRNGKey(0)
    k1, k2 = jax.random.split(key)

    N, C, H, W = 2, 4, 16, 16
    stride = 2

    d = jax.random.uniform(k1, (N, C, H, W), dtype=jnp.float32) * 10.0
    mask = (jax.random.uniform(k2, (N, C, H, W)) > 0.5).astype(jnp.float32)
    d = d * mask   # sparse depth: zero where mask == 0, as in PENet usage

    d_res, m_res = sparse_downsample_close(d, mask, stride)
    jax.block_until_ready((d_res, m_res))

    d_ref, m_ref = _reference(d, mask, stride)
    assert d_res.shape == (N, C, H // stride, W // stride)
    assert m_res.shape == (N, C, H // stride, W // stride)
    assert jnp.allclose(d_res, d_ref, atol=1e-5, rtol=1e-5)
    assert jnp.allclose(m_res, m_ref, atol=1e-5, rtol=1e-5)

    print("KERNEL_OK")
</pallas_src>

<mosaic_0001>
module attributes {stable_mosaic.version = 11 : i64} {
  func.func @kernel(%arg0: i32, %arg1: memref<64x32xf32, #tpu.memory_space<vmem>>, %arg2: memref<64x32xf32, #tpu.memory_space<vmem>>, %arg3: memref<15x8xbf16, #tpu.memory_space<vmem>>, %arg4: memref<64x8xf32, #tpu.memory_space<vmem>>, %arg5: memref<64x8xf32, #tpu.memory_space<vmem>>) attributes {dimension_semantics = [#tpu.dimension_semantics<parallel>], iteration_bounds = array<i64: 1>, scalar_prefetch = 0 : i64, scratch_operands = 0 : i64, tpu.core_type = #tpu.core_type<tc>, window_params = [{transform_indices = @transform_0, window_bounds = array<i64: 64, 32>}, {transform_indices = @transform_1, window_bounds = array<i64: 64, 32>}, {pipeline_mode = #tpu.pipeline_mode<synchronous>, transform_indices = @transform_2, window_bounds = array<i64: 15, 8>}, {transform_indices = @transform_3, window_bounds = array<i64: 64, 8>}, {transform_indices = @transform_4, window_bounds = array<i64: 64, 8>}]} {
    %c0 = arith.constant 0 : index
    %c0_0 = arith.constant 0 : index
    %0 = vector.load %arg3[%c0, %c0_0] : memref<15x8xbf16, #tpu.memory_space<vmem>>, vector<15x8xbf16>
    %c0_1 = arith.constant 0 : index
    %c0_2 = arith.constant 0 : index
    %1 = vector.load %arg1[%c0_1, %c0_2] : memref<64x32xf32, #tpu.memory_space<vmem>>, vector<64x16xf32>
    %c0_3 = arith.constant 0 : index
    %c0_4 = arith.constant 0 : index
    %2 = vector.load %arg2[%c0_3, %c0_4] : memref<64x32xf32, #tpu.memory_space<vmem>>, vector<64x16xf32>
    %cst = arith.constant 1.000000e+00 : f32
    %3 = vector.broadcast %cst : f32 to vector<64x16xf32>
    %4 = arith.subf %2, %3 : vector<64x16xf32>
    %cst_5 = arith.constant 6.000000e+02 : f32
    %5 = vector.broadcast %cst_5 : f32 to vector<64x16xf32>
    %6 = arith.mulf %4, %5 : vector<64x16xf32>
    %7 = arith.subf %6, %1 : vector<64x16xf32>
    %c0_6 = arith.constant 0 : index
    %c16 = arith.constant 16 : index
    %8 = vector.load %arg1[%c0_6, %c16] : memref<64x32xf32, #tpu.memory_space<vmem>>, vector<64x16xf32>
    %c0_7 = arith.constant 0 : index
    %c16_8 = arith.constant 16 : index
    %9 = vector.load %arg2[%c0_7, %c16_8] : memref<64x32xf32, #tpu.memory_space<vmem>>, vector<64x16xf32>
    %cst_9 = arith.constant 1.000000e+00 : f32
    %10 = vector.broadcast %cst_9 : f32 to vector<64x16xf32>
    %11 = arith.subf %9, %10 : vector<64x16xf32>
    %cst_10 = arith.constant 6.000000e+02 : f32
    %12 = vector.broadcast %cst_10 : f32 to vector<64x16xf32>
    %13 = arith.mulf %11, %12 : vector<64x16xf32>
    %14 = arith.subf %13, %8 : vector<64x16xf32>
    %15 = arith.maximumf %7, %14 : vector<64x16xf32>
    %16 = arith.maximumf %2, %9 : vector<64x16xf32>
    %17 = vector.extract_strided_slice %15 {offsets = [0, 0], sizes = [64, 15], strides = [1, 1]} : vector<64x16xf32> to vector<64x15xf32>
    %18 = vector.extract_strided_slice %16 {offsets = [0, 0], sizes = [64, 15], strides = [1, 1]} : vector<64x16xf32> to vector<64x15xf32>
    %19 = vector.extract_strided_slice %15 {offsets = [0, 1], sizes = [64, 15], strides = [1, 1]} : vector<64x16xf32> to vector<64x15xf32>
    %20 = arith.maximumf %17, %19 : vector<64x15xf32>
    %21 = vector.extract_strided_slice %16 {offsets = [0, 1], sizes = [64, 15], strides = [1, 1]} : vector<64x16xf32> to vector<64x15xf32>
    %22 = arith.maximumf %18, %21 : vector<64x15xf32>
    %23 = arith.truncf %22 : vector<64x15xf32> to vector<64x15xbf16>
    %cst_11 = arith.constant dense<0.000000e+00> : vector<64x8xf32>
    %24 = tpu.matmul %23, %0, %cst_11 {dimension_numbers = #tpu.dot_dimension_numbers<[1], [0], [0], [1], [0, 0, 1, 1], [], []>} : vector<64x15xbf16>, vector<15x8xbf16>, vector<64x8xf32> -> vector<64x8xf32>
    %25 = arith.truncf %20 : vector<64x15xf32> to vector<64x15xbf16>
    %26 = arith.extf %25 : vector<64x15xbf16> to vector<64x15xf32>
    %27 = arith.subf %20, %26 : vector<64x15xf32>
    %28 = arith.truncf %27 : vector<64x15xf32> to vector<64x15xbf16>
    %29 = arith.extf %28 : vector<64x15xbf16> to vector<64x15xf32>
    %30 = arith.subf %27, %29 : vector<64x15xf32>
    %31 = arith.truncf %30 : vector<64x15xf32> to vector<64x15xbf16>
    %cst_12 = arith.constant dense<0.000000e+00> : vector<64x8xf32>
    %32 = tpu.matmul %25, %0, %cst_12 {dimension_numbers = #tpu.dot_dimension_numbers<[1], [0], [0], [1], [0, 0, 1, 1], [], []>} : vector<64x15xbf16>, vector<15x8xbf16>, vector<64x8xf32> -> vector<64x8xf32>
    %cst_13 = arith.constant dense<0.000000e+00> : vector<64x8xf32>
    %33 = tpu.matmul %28, %0, %cst_13 {dimension_numbers = #tpu.dot_dimension_numbers<[1], [0], [0], [1], [0, 0, 1, 1], [], []>} : vector<64x15xbf16>, vector<15x8xbf16>, vector<64x8xf32> -> vector<64x8xf32>
    %cst_14 = arith.constant dense<0.000000e+00> : vector<64x8xf32>
    %34 = tpu.matmul %31, %0, %cst_14 {dimension_numbers = #tpu.dot_dimension_numbers<[1], [0], [0], [1], [0, 0, 1, 1], [], []>} : vector<64x15xbf16>, vector<15x8xbf16>, vector<64x8xf32> -> vector<64x8xf32>
    %35 = arith.addf %33, %34 : vector<64x8xf32>
    %36 = arith.addf %32, %35 : vector<64x8xf32>
    %cst_15 = arith.constant 1.000000e+00 : f32
    %37 = vector.broadcast %cst_15 : f32 to vector<64x8xf32>
    %38 = arith.subf %24, %37 : vector<64x8xf32>
    %cst_16 = arith.constant 6.000000e+02 : f32
    %39 = vector.broadcast %cst_16 : f32 to vector<64x8xf32>
    %40 = arith.mulf %38, %39 : vector<64x8xf32>
    %41 = arith.subf %40, %36 : vector<64x8xf32>
    %c0_17 = arith.constant 0 : index
    %c0_18 = arith.constant 0 : index
    %42 = vector.load %arg4[%c0_17, %c0_18] : memref<64x8xf32, #tpu.memory_space<vmem>>, vector<64x8xf32>
    tpu.vector_store %arg4[%c0_17, %c0_18], %41 {strides = array<i32>} : memref<64x8xf32, #tpu.memory_space<vmem>>, vector<64x8xf32>,
    %c0_19 = arith.constant 0 : index
    %c0_20 = arith.constant 0 : index
    %43 = vector.load %arg5[%c0_19, %c0_20] : memref<64x8xf32, #tpu.memory_space<vmem>>, vector<64x8xf32>
    tpu.vector_store %arg5[%c0_19, %c0_20], %24 {strides = array<i32>} : memref<64x8xf32, #tpu.memory_space<vmem>>, vector<64x8xf32>,
    return
  }
  func.func @transform_0(%arg0: i32) -> (i32, i32) {
    %c0_i32 = arith.constant 0 : i32
    %c0_i32_0 = arith.constant 0 : i32
    return %arg0, %c0_i32 : i32, i32
  }
  func.func @transform_1(%arg0: i32) -> (i32, i32) {
    %c0_i32 = arith.constant 0 : i32
    %c0_i32_0 = arith.constant 0 : i32
    return %arg0, %c0_i32 : i32, i32
  }
  func.func @transform_2(%arg0: i32) -> (i32, i32) {
    %c0_i32 = arith.constant 0 : i32
    %c0_i32_0 = arith.constant 0 : i32
    %c0_i32_1 = arith.constant 0 : i32
    return %c0_i32, %c0_i32_0 : i32, i32
  }
  func.func @transform_3(%arg0: i32) -> (i32, i32) {
    %c0_i32 = arith.constant 0 : i32
    %c0_i32_0 = arith.constant 0 : i32
    return %arg0, %c0_i32 : i32, i32
  }
  func.func @transform_4(%arg0: i32) -> (i32, i32) {
    %c0_i32 = arith.constant 0 : i32
    %c0_i32_0 = arith.constant 0 : i32
    return %arg0, %c0_i32 : i32, i32
  }
}

</mosaic_0001>

<llo_original>
// kernel: tpu_custom_call.1
$region0: #{tpu_custom_call.1}
  #allocation0 [shape = 'u32[]', space=smem, size = 0x4, offset = 0x4, fixed_abs, tag = 'smem constant byte address 0x4 - core index']
  #allocation1 [shape = 'u32[72,128]{1,0:T(1,128)}', space=vmem, size = 0x9000, scoped, tag = 'internal scratch']
  %s0 = inlined_call_operand.vmem [shape: f32[64,32], index: 0, kind: input, shape index: {}]
  %s1 = inlined_call_operand.vmem [shape: f32[64,32], index: 1, kind: input, shape index: {}]
  %s2 = inlined_call_operand.vmem [shape: bf16[15,8], index: 2, kind: input, shape index: {}]
  %s3 = inlined_call_operand.vmem [shape: f32[64,8], index: 3, kind: output, shape index: {0}]
  %s4 = inlined_call_operand.vmem [shape: f32[64,8], index: 4, kind: output, shape index: {1}]
  %5 = xla_tuple %s3, %s4
  %s6 = sld [smem:[#allocation0]]
  $region30: #{tpu_custom_call.1} parent=0
    _
  %s8 = ssub.s32 1, %s6
  %s9 = scalar_select 0, %s8, %s6
  // Predicated region
  $region2: #{tpu_custom_call.1} parent=0 // pred_check
    _
  $region3: #{tpu_custom_call.1} parent=0 // pred_check_branch
    %11 = sbr.rel (0) target = $region5
  $region4: #{tpu_custom_call.1} parent=0 // pred_region
    _
  $region5: #{tpu_custom_call.1} parent=0 // pred_fallthru
    _
  // Predicated region
  $region6: #{tpu_custom_call.1} parent=0 // pred_check
    _
  $region7: #{tpu_custom_call.1} parent=0 // pred_check_branch
    %13 = sbr.rel (0) target = $region9
  $region8: #{tpu_custom_call.1} parent=0 // pred_region
    _
  $region9: #{tpu_custom_call.1} parent=0 // pred_fallthru
    _
  // Predicated region
  $region10: #{tpu_custom_call.1} parent=0 // pred_check
    _
  $region11: #{tpu_custom_call.1} parent=0 // pred_check_branch
    %15 = sbr.rel (0) target = $region13
  $region12: #{tpu_custom_call.1} parent=0 // pred_region
    _
  $region13: #{tpu_custom_call.1} parent=0 // pred_fallthru
    _
  %v17 = vld [vmem:[%s2] sm:$0xf]
  %v18 = vld [vmem:[%s2 + $0x4] sm:$0xf]
  %v19 = vld [vmem:[%s0] sm:$0xff]
  %v20 = vld [vmem:[%s0 + $0x8] sm:$0xff]
  %v21 = vld [vmem:[%s0 + $0x10] sm:$0xff]
  %v22 = vld [vmem:[%s0 + $0x18] sm:$0xff]
  %v23 = vld [vmem:[%s0 + $0x20] sm:$0xff]
  %v24 = vld [vmem:[%s0 + $0x28] sm:$0xff]
  %v25 = vld [vmem:[%s0 + $0x30] sm:$0xff]
  %v26 = vld [vmem:[%s0 + $0x38] sm:$0xff]
  %v27 = vld [vmem:[%s1] sm:$0xff]
  %v28 = vld [vmem:[%s1 + $0x8] sm:$0xff]
  %v29 = vld [vmem:[%s1 + $0x10] sm:$0xff]
  %v30 = vld [vmem:[%s1 + $0x18] sm:$0xff]
  %v31 = vld [vmem:[%s1 + $0x20] sm:$0xff]
  %v32 = vld [vmem:[%s1 + $0x28] sm:$0xff]
  %v33 = vld [vmem:[%s1 + $0x30] sm:$0xff]
  %v34 = vld [vmem:[%s1 + $0x38] sm:$0xff]
  %v35 = vsub.f32 %v27, 1.0
  %v36 = vsub.f32 %v28, 1.0
  %v37 = vsub.f32 %v29, 1.0
  %v38 = vsub.f32 %v30, 1.0
  %v39 = vsub.f32 %v31, 1.0
  %v40 = vsub.f32 %v32, 1.0
  %v41 = vsub.f32 %v33, 1.0
  %v42 = vsub.f32 %v34, 1.0
  %v43 = vmul.f32 %v35, 600.0
  %v44 = vmul.f32 %v36, 600.0
  %v45 = vmul.f32 %v37, 600.0
  %v46 = vmul.f32 %v38, 600.0
  %v47 = vmul.f32 %v39, 600.0
  %v48 = vmul.f32 %v40, 600.0
  %v49 = vmul.f32 %v41, 600.0
  %v50 = vmul.f32 %v42, 600.0
  %v51 = vsub.f32 %v43, %v19
  %v52 = vsub.f32 %v44, %v20
  %v53 = vsub.f32 %v45, %v21
  %v54 = vsub.f32 %v46, %v22
  %v55 = vsub.f32 %v47, %v23
  %v56 = vsub.f32 %v48, %v24
  %v57 = vsub.f32 %v49, %v25
  %v58 = vsub.f32 %v50, %v26
  %67 = vrot.lane.b32.xlu0 %v51, 112
  %v68 = vpop.permute.xlu0 %67
  %69 = vrot.lane.b32.xlu0 %v52, 112
  %v70 = vpop.permute.xlu0 %69
  %71 = vrot.lane.b32.xlu0 %v53, 112
  %v72 = vpop.permute.xlu0 %71
  %73 = vrot.lane.b32.xlu0 %v54, 112
  %v74 = vpop.permute.xlu0 %73
  %75 = vrot.lane.b32.xlu0 %v55, 112
  %v76 = vpop.permute.xlu0 %75
  %77 = vrot.lane.b32.xlu0 %v56, 112
  %v78 = vpop.permute.xlu0 %77
  %79 = vrot.lane.b32.xlu0 %v57, 112
  %v80 = vpop.permute.xlu0 %79
  %81 = vrot.lane.b32.xlu0 %v58, 112
  %v82 = vpop.permute.xlu0 %81
  %v91 = vmax.f32 %v51, %v68
  %v92 = vmax.f32 %v52, %v70
  %v93 = vmax.f32 %v53, %v72
  %v94 = vmax.f32 %v54, %v74
  %v95 = vmax.f32 %v55, %v76
  %v96 = vmax.f32 %v56, %v78
  %v97 = vmax.f32 %v57, %v80
  %v98 = vmax.f32 %v58, %v82
  %107 = vrot.lane.b32.xlu0 %v27, 112
  %v108 = vpop.permute.xlu0 %107
  %109 = vrot.lane.b32.xlu0 %v28, 112
  %v110 = vpop.permute.xlu0 %109
  %111 = vrot.lane.b32.xlu0 %v29, 112
  %v112 = vpop.permute.xlu0 %111
  %113 = vrot.lane.b32.xlu0 %v30, 112
  %v114 = vpop.permute.xlu0 %113
  %115 = vrot.lane.b32.xlu0 %v31, 112
  %v116 = vpop.permute.xlu0 %115
  %117 = vrot.lane.b32.xlu0 %v32, 112
  %v118 = vpop.permute.xlu0 %117
  %119 = vrot.lane.b32.xlu0 %v33, 112
  %v120 = vpop.permute.xlu0 %119
  %121 = vrot.lane.b32.xlu0 %v34, 112
  %v122 = vpop.permute.xlu0 %121
  %v131 = vmax.f32 %v27, %v108
  %v132 = vmax.f32 %v28, %v110
  %v133 = vmax.f32 %v29, %v112
  %v134 = vmax.f32 %v30, %v114
  %v135 = vmax.f32 %v31, %v116
  %v136 = vmax.f32 %v32, %v118
  %v137 = vmax.f32 %v33, %v120
  %v138 = vmax.f32 %v34, %v122
  %147 = vrot.lane.b32.xlu0 %v91, 127
  %v148 = vpop.permute.xlu0 %147
  %149 = vrot.lane.b32.xlu0 %v92, 127
  %v150 = vpop.permute.xlu0 %149
  %151 = vrot.lane.b32.xlu0 %v93, 127
  %v152 = vpop.permute.xlu0 %151
  %153 = vrot.lane.b32.xlu0 %v94, 127
  %v154 = vpop.permute.xlu0 %153
  %155 = vrot.lane.b32.xlu0 %v95, 127
  %v156 = vpop.permute.xlu0 %155
  %157 = vrot.lane.b32.xlu0 %v96, 127
  %v158 = vpop.permute.xlu0 %157
  %159 = vrot.lane.b32.xlu0 %v97, 127
  %v160 = vpop.permute.xlu0 %159
  %161 = vrot.lane.b32.xlu0 %v98, 127
  %v162 = vpop.permute.xlu0 %161
  %v171 = vmax.f32 %v91, %v148
  %v172 = vmax.f32 %v92, %v150
  %v173 = vmax.f32 %v93, %v152
  %v174 = vmax.f32 %v94, %v154
  %v175 = vmax.f32 %v95, %v156
  %v176 = vmax.f32 %v96, %v158
  %v177 = vmax.f32 %v97, %v160
  %v178 = vmax.f32 %v98, %v162
  %187 = vrot.lane.b32.xlu0 %v131, 127
  %v188 = vpop.permute.xlu0 %187
  %189 = vrot.lane.b32.xlu0 %v132, 127
  %v190 = vpop.permute.xlu0 %189
  %191 = vrot.lane.b32.xlu0 %v133, 127
  %v192 = vpop.permute.xlu0 %191
  %193 = vrot.lane.b32.xlu0 %v134, 127
  %v194 = vpop.permute.xlu0 %193
  %195 = vrot.lane.b32.xlu0 %v135, 127
  %v196 = vpop.permute.xlu0 %195
  %197 = vrot.lane.b32.xlu0 %v136, 127
  %v198 = vpop.permute.xlu0 %197
  %199 = vrot.lane.b32.xlu0 %v137, 127
  %v200 = vpop.permute.xlu0 %199
  %201 = vrot.lane.b32.xlu0 %v138, 127
  %v202 = vpop.permute.xlu0 %201
  %v211 = vmax.f32 %v131, %v188
  %v212 = vmax.f32 %v132, %v190
  %v213 = vmax.f32 %v133, %v192
  %v214 = vmax.f32 %v134, %v194
  %v215 = vmax.f32 %v135, %v196
  %v216 = vmax.f32 %v136, %v198
  %v217 = vmax.f32 %v137, %v200
  %v218 = vmax.f32 %v138, %v202
  %v219 = vpack.c.bf16 %v212, %v211
  %v220 = vpack.c.bf16 %v214, %v213
  %v221 = vpack.c.bf16 %v216, %v215
  %v222 = vpack.c.bf16 %v218, %v217
  %v225 = vunpack.c.l.b16 %v17
  %v226 = vunpack.c.l.b16 %v18
  %v227 = vpack.c.b16 %v226, %v225
  %vm228 = vcmask 121856
  %v230 = vsel %vm228, %v219, 0
  %v233 = vsel %vm228, %v220, 0
  %v236 = vsel %vm228, %v221, 0
  %v239 = vsel %vm228, %v222, 0
  %vm241 = vcmask 1046528
  %vm242 = vcmask 1047552
  %v243 = vsel %vm241, 4294967295, 65535
  %v244 = vsel %vm242, %v243, 0
  %v246 = vand.u32 %v227, %v244
  %248 = vmatpush.bf16.msra.mxu0 0
  %249 = vmatpush.bf16.msra.mxu0 0
  %250 = vmatpush.bf16.msra.mxu0 0
  %251 = vmatpush.bf16.msra.mxu0 0
  %252 = vmatpush.bf16.msra.mxu0 0
  %253 = vmatpush.bf16.msra.mxu0 0
  %254 = vmatpush.bf16.msra.mxu0 0
  %255 = vmatpush.bf16.msra.mxu0 %v246
  %256 = vmatmul.bf16.gmra.mxu0 %v230
  %v257 = vpop.f32.mrf.mxu0
  %v258 = vadd.f32 0.0, %v257
  %v259 = vpop.f32.mrf.mxu0
  %v260 = vadd.f32 0.0, %v259
  %261 = vmatmul.bf16.gmra.mxu0 %v233
  %v262 = vpop.f32.mrf.mxu0
  %v263 = vadd.f32 0.0, %v262
  %v264 = vpop.f32.mrf.mxu0
  %v265 = vadd.f32 0.0, %v264
  %266 = vmatmul.bf16.gmra.mxu0 %v236
  %v267 = vpop.f32.mrf.mxu0
  %v268 = vadd.f32 0.0, %v267
  %v269 = vpop.f32.mrf.mxu0
  %v270 = vadd.f32 0.0, %v269
  %271 = vmatmul.bf16.gmra.mxu0 %v239
  %v272 = vpop.f32.mrf.mxu0
  %v273 = vadd.f32 0.0, %v272
  %v274 = vpop.f32.mrf.mxu0
  %v275 = vadd.f32 0.0, %v274
  %276 = vdwg.mxu0
  %v277 = vpack.c.bf16 %v171, %v171
  %v278 = vpack.c.bf16 %v172, %v172
  %v279 = vpack.c.bf16 %v173, %v173
  %v280 = vpack.c.bf16 %v174, %v174
  %v281 = vpack.c.bf16 %v175, %v175
  %v282 = vpack.c.bf16 %v176, %v176
  %v283 = vpack.c.bf16 %v177, %v177
  %v284 = vpack.c.bf16 %v178, %v178
  %v285 = vunpack.c.l.bf16 %v277
  %v286 = vunpack.c.l.bf16 %v278
  %v287 = vunpack.c.l.bf16 %v279
  %v288 = vunpack.c.l.bf16 %v280
  %v289 = vunpack.c.l.bf16 %v281
  %v290 = vunpack.c.l.bf16 %v282
  %v291 = vunpack.c.l.bf16 %v283
  %v292 = vunpack.c.l.bf16 %v284
  %v293 = vsub.f32 %v171, %v285
  %v294 = vsub.f32 %v172, %v286
  %v295 = vsub.f32 %v173, %v287
  %v296 = vsub.f32 %v174, %v288
  %v297 = vsub.f32 %v175, %v289
  %v298 = vsub.f32 %v176, %v290
  %v299 = vsub.f32 %v177, %v291
  %v300 = vsub.f32 %v178, %v292
  %v301 = vpack.c.bf16 %v293, %v293
  %v302 = vpack.c.bf16 %v294, %v294
  %v303 = vpack.c.bf16 %v295, %v295
  %v304 = vpack.c.bf16 %v296, %v296
  %v305 = vpack.c.bf16 %v297, %v297
  %v306 = vpack.c.bf16 %v298, %v298
  %v307 = vpack.c.bf16 %v299, %v299
  %v308 = vpack.c.bf16 %v300, %v300
  %v309 = vunpack.c.l.bf16 %v301
  %v310 = vunpack.c.l.bf16 %v302
  %v311 = vunpack.c.l.bf16 %v303
  %v312 = vunpack.c.l.bf16 %v304
  %v313 = vunpack.c.l.bf16 %v305
  %v314 = vunpack.c.l.bf16 %v306
  %v315 = vunpack.c.l.bf16 %v307
  %v316 = vunpack.c.l.bf16 %v308
  %v317 = vsub.f32 %v293, %v309
  %v318 = vsub.f32 %v294, %v310
  %v319 = vsub.f32 %v295, %v311
  %v320 = vsub.f32 %v296, %v312
  %v321 = vsub.f32 %v297, %v313
  %v322 = vsub.f32 %v298, %v314
  %v323 = vsub.f32 %v299, %v315
  %v324 = vsub.f32 %v300, %v316
  %v325 = vpack.c.bf16 %v318, %v317
  %v326 = vpack.c.bf16 %v320, %v319
  %v327 = vpack.c.bf16 %v322, %v321
  %v328 = vpack.c.bf16 %v324, %v323
  %v330 = vsel %vm228, %v325, 0
  %v333 = vsel %vm228, %v326, 0
  %v336 = vsel %vm228, %v327, 0
  %v339 = vsel %vm228, %v328, 0
  %341 = vmatpush.bf16.msra.mxu0 0
  %342 = vmatpush.bf16.msra.mxu0 0
  %343 = vmatpush.bf16.msra.mxu0 0
  %344 = vmatpush.bf16.msra.mxu0 0
  %345 = vmatpush.bf16.msra.mxu0 0
  %346 = vmatpush.bf16.msra.mxu0 0
  %347 = vmatpush.bf16.msra.mxu0 0
  %348 = vmatpush.bf16.msra.mxu0 %v246
  %349 = vmatmul.bf16.gmra.mxu0 %v330
  %v350 = vpop.f32.mrf.mxu0
  %v351 = vadd.f32 0.0, %v350
  %v352 = vpop.f32.mrf.mxu0
  %v353 = vadd.f32 0.0, %v352
  %354 = vmatmul.bf16.gmra.mxu0 %v333
  %v355 = vpop.f32.mrf.mxu0
  %v356 = vadd.f32 0.0, %v355
  %v357 = vpop.f32.mrf.mxu0
  %v358 = vadd.f32 0.0, %v357
  %359 = vmatmul.bf16.gmra.mxu0 %v336
  %v360 = vpop.f32.mrf.mxu0
  %v361 = vadd.f32 0.0, %v360
  %v362 = vpop.f32.mrf.mxu0
  %v363 = vadd.f32 0.0, %v362
  %364 = vmatmul.bf16.gmra.mxu0 %v339
  %v365 = vpop.f32.mrf.mxu0
  %v366 = vadd.f32 0.0, %v365
  %v367 = vpop.f32.mrf.mxu0
  %v368 = vadd.f32 0.0, %v367
  %369 = vdwg.mxu0
  %v378 = vunpack.c.l.b16 %v301
  %v379 = vunpack.c.l.b16 %v302
  %v380 = vunpack.c.l.b16 %v303
  %v381 = vunpack.c.l.b16 %v304
  %v382 = vunpack.c.l.b16 %v305
  %v383 = vunpack.c.l.b16 %v306
  %v384 = vunpack.c.l.b16 %v307
  %v385 = vunpack.c.l.b16 %v308
  %v386 = vpack.c.b16 %v379, %v378
  %v387 = vpack.c.b16 %v381, %v380
  %v388 = vpack.c.b16 %v383, %v382
  %v389 = vpack.c.b16 %v385, %v384
  %v391 = vsel %vm228, %v386, 0
  %v394 = vsel %vm228, %v387, 0
  %v397 = vsel %vm228, %v388, 0
  %v400 = vsel %vm228, %v389, 0
  %402 = vmatpush.bf16.msra.mxu0 0
  %403 = vmatpush.bf16.msra.mxu0 0
  %404 = vmatpush.bf16.msra.mxu0 0
  %405 = vmatpush.bf16.msra.mxu0 0
  %406 = vmatpush.bf16.msra.mxu0 0
  %407 = vmatpush.bf16.msra.mxu0 0
  %408 = vmatpush.bf16.msra.mxu0 0
  %409 = vmatpush.bf16.msra.mxu0 %v246
  %410 = vmatmul.bf16.gmra.mxu0 %v391
  %v411 = vpop.f32.mrf.mxu0
  %v412 = vadd.f32 %v351, %v411
  %v413 = vpop.f32.mrf.mxu0
  %v414 = vadd.f32 %v353, %v413
  %415 = vmatmul.bf16.gmra.mxu0 %v394
  %v416 = vpop.f32.mrf.mxu0
  %v417 = vadd.f32 %v356, %v416
  %v418 = vpop.f32.mrf.mxu0
  %v419 = vadd.f32 %v358, %v418
  %420 = vmatmul.bf16.gmra.mxu0 %v397
  %v421 = vpop.f32.mrf.mxu0
  %v422 = vadd.f32 %v361, %v421
  %v423 = vpop.f32.mrf.mxu0
  %v424 = vadd.f32 %v363, %v423
  %425 = vmatmul.bf16.gmra.mxu0 %v400
  %v426 = vpop.f32.mrf.mxu0
  %v427 = vadd.f32 %v366, %v426
  %v428 = vpop.f32.mrf.mxu0
  %v429 = vadd.f32 %v368, %v428
  %430 = vdwg.mxu0
  %v439 = vunpack.c.l.b16 %v277
  %v440 = vunpack.c.l.b16 %v278
  %v441 = vunpack.c.l.b16 %v279
  %v442 = vunpack.c.l.b16 %v280
  %v443 = vunpack.c.l.b16 %v281
  %v444 = vunpack.c.l.b16 %v282
  %v445 = vunpack.c.l.b16 %v283
  %v446 = vunpack.c.l.b16 %v284
  %v447 = vpack.c.b16 %v440, %v439
  %v448 = vpack.c.b16 %v442, %v441
  %v449 = vpack.c.b16 %v444, %v443
  %v450 = vpack.c.b16 %v446, %v445
  %v452 = vsel %vm228, %v447, 0
  %v455 = vsel %vm228, %v448, 0
  %v458 = vsel %vm228, %v449, 0
  %v461 = vsel %vm228, %v450, 0
  %463 = vmatpush.bf16.msra.mxu0 0
  %464 = vmatpush.bf16.msra.mxu0 0
  %465 = vmatpush.bf16.msra.mxu0 0
  %466 = vmatpush.bf16.msra.mxu0 0
  %467 = vmatpush.bf16.msra.mxu0 0
  %468 = vmatpush.bf16.msra.mxu0 0
  %469 = vmatpush.bf16.msra.mxu0 0
  %470 = vmatpush.bf16.msra.mxu0 %v246
  %471 = vmatmul.bf16.gmra.mxu0 %v452
  %v472 = vpop.f32.mrf.mxu0
  %v473 = vadd.f32 %v412, %v472
  %v474 = vpop.f32.mrf.mxu0
  %v475 = vadd.f32 %v414, %v474
  %476 = vmatmul.bf16.gmra.mxu0 %v455
  %v477 = vpop.f32.mrf.mxu0
  %v478 = vadd.f32 %v417, %v477
  %v479 = vpop.f32.mrf.mxu0
  %v480 = vadd.f32 %v419, %v479
  %481 = vmatmul.bf16.gmra.mxu0 %v458
  %v482 = vpop.f32.mrf.mxu0
  %v483 = vadd.f32 %v422, %v482
  %v484 = vpop.f32.mrf.mxu0
  %v485 = vadd.f32 %v424, %v484
  %486 = vmatmul.bf16.gmra.mxu0 %v461
  %v487 = vpop.f32.mrf.mxu0
  %v488 = vadd.f32 %v427, %v487
  %v489 = vpop.f32.mrf.mxu0
  %v490 = vadd.f32 %v429, %v489
  %491 = vdwg.mxu0
  %v492 = vsub.f32 %v258, 1.0
  %v493 = vsub.f32 %v260, 1.0
  %v494 = vsub.f32 %v263, 1.0
  %v495 = vsub.f32 %v265, 1.0
  %v496 = vsub.f32 %v268, 1.0
  %v497 = vsub.f32 %v270, 1.0
  %v498 = vsub.f32 %v273, 1.0
  %v499 = vsub.f32 %v275, 1.0
  %v500 = vmul.f32 %v492, 600.0
  %v501 = vmul.f32 %v493, 600.0
  %v502 = vmul.f32 %v494, 600.0
  %v503 = vmul.f32 %v495, 600.0
  %v504 = vmul.f32 %v496, 600.0
  %v505 = vmul.f32 %v497, 600.0
  %v506 = vmul.f32 %v498, 600.0
  %v507 = vmul.f32 %v499, 600.0
  %v508 = vsub.f32 %v500, %v473
  %v509 = vsub.f32 %v501, %v475
  %v510 = vsub.f32 %v502, %v478
  %v511 = vsub.f32 %v503, %v480
  %v512 = vsub.f32 %v504, %v483
  %v513 = vsub.f32 %v505, %v485
  %v514 = vsub.f32 %v506, %v488
  %v515 = vsub.f32 %v507, %v490
  %vm516 = vcmask 64512
  %517 = vst.msk [vmem:[%s3] sm:$0xff] %vm516, %v508
  %518 = vst.msk [vmem:[%s3 + $0x8] sm:$0xff] %vm516, %v509
  %519 = vst.msk [vmem:[%s3 + $0x10] sm:$0xff] %vm516, %v510
  %520 = vst.msk [vmem:[%s3 + $0x18] sm:$0xff] %vm516, %v511
  %521 = vst.msk [vmem:[%s3 + $0x20] sm:$0xff] %vm516, %v512
  %522 = vst.msk [vmem:[%s3 + $0x28] sm:$0xff] %vm516, %v513
  %523 = vst.msk [vmem:[%s3 + $0x30] sm:$0xff] %vm516, %v514
  %524 = vst.msk [vmem:[%s3 + $0x38] sm:$0xff] %vm516, %v515
  %525 = vst.msk [vmem:[%s4] sm:$0xff] %vm516, %v258
  %526 = vst.msk [vmem:[%s4 + $0x8] sm:$0xff] %vm516, %v260
  %527 = vst.msk [vmem:[%s4 + $0x10] sm:$0xff] %vm516, %v263
  %528 = vst.msk [vmem:[%s4 + $0x18] sm:$0xff] %vm516, %v265
  %529 = vst.msk [vmem:[%s4 + $0x20] sm:$0xff] %vm516, %v268
  %530 = vst.msk [vmem:[%s4 + $0x28] sm:$0xff] %vm516, %v270
  %531 = vst.msk [vmem:[%s4 + $0x30] sm:$0xff] %vm516, %v273
  %532 = vst.msk [vmem:[%s4 + $0x38] sm:$0xff] %vm516, %v275
  // Predicated region
  $region14: #{tpu_custom_call.1} parent=0 // pred_check
    _
  $region15: #{tpu_custom_call.1} parent=0 // pred_check_branch
    %534 = sbr.rel (0) target = $region17
  $region16: #{tpu_custom_call.1} parent=0 // pred_region
    _
  $region17: #{tpu_custom_call.1} parent=0 // pred_fallthru
    _
  // Predicated region
  $region18: #{tpu_custom_call.1} parent=0 // pred_check
    _
  $region19: #{tpu_custom_call.1} parent=0 // pred_check_branch
    %536 = sbr.rel (0) target = $region21
  $region20: #{tpu_custom_call.1} parent=0 // pred_region
    _
  $region21: #{tpu_custom_call.1} parent=0 // pred_fallthru
    _
  // Predicated region
  $region22: #{tpu_custom_call.1} parent=0 // pred_check
    _
  $region23: #{tpu_custom_call.1} parent=0 // pred_check_branch
    %538 = sbr.rel (0) target = $region25
  $region24: #{tpu_custom_call.1} parent=0 // pred_region
    _
  $region25: #{tpu_custom_call.1} parent=0 // pred_fallthru
    _
  // Predicated region
  $region26: #{tpu_custom_call.1} parent=0 // pred_check
    _
  $region27: #{tpu_custom_call.1} parent=0 // pred_check_branch
    %540 = sbr.rel (0) target = $region29
  $region28: #{tpu_custom_call.1} parent=0 // pred_region
    _
  $region29: #{tpu_custom_call.1} parent=0 // pred_fallthru
    _

</llo_original>
